<compile_context>
chip_gen: v7x
topology: tpu7x:2x2x1
jax: 0.10.0
libtpu: 0.0.40
codegen_flags: <defaults>
</compile_context>

<pallas_src>
import jax
import jax.numpy as jnp
from jax.experimental import pallas as pl
from jax.experimental.pallas import tpu as pltpu


def _round_up(x, m):
    return ((x + m - 1) // m) * m


def _cdiv(a, b):
    return (a + b - 1) // b


def _v_layout(V, tile_v, n_split):
    """Balanced V tiling: num_k tiles of width tk (128-aligned), num_k % n_split == 0.

    Over-padding is bounded by 128 * num_k instead of (tk - 128)."""
    v128 = _round_up(V, 128)
    tk_cap = max(128, _round_up(tile_v, 128))
    num_k = max(n_split, _cdiv(v128, tk_cap))
    num_k = _round_up(num_k, n_split)
    tk = _round_up(_cdiv(v128, num_k), 128)
    return tk, num_k, num_k * tk


def prepare_bow_weights(weight, *, tile_v=4096, n_split=1, compute_dtype=jnp.float32):
    """Pad/cast the call-invariant (C, V) weight ONCE, outside the forward path."""
    _, V = weight.shape
    _, _, v_pad = _v_layout(V, tile_v, n_split)
    w = weight.astype(compute_dtype)
    if v_pad != V:
        w = jnp.pad(w, ((0, 0), (0, v_pad - V)))
    return w


def _bow_linear_kernel(x_ref, w_ref, o_ref):
    """o[b, c] += sum_v x[b, v] * w[c, v]; o block is resident across the V axis."""
    k = pl.program_id(2)

    @pl.when(k == 0)
    def _():
        o_ref[...] = jnp.zeros_like(o_ref)

    # Contract the shared, lane-dense V dim of x (tb, tk) and w (C, tk) on the
    # MXU — no weight transpose is materialized and the tiny C stays in sublanes.
    o_ref[...] += jax.lax.dot_general(
        x_ref[...], w_ref[...],
        dimension_numbers=(((1,), (1,)), ((), ())),
        preferred_element_type=jnp.float32)


def _vmem_budget_bytes():
    # Per-generation budget: ~60% of physical VMEM, capped at 96 MiB.
    # v7x: 64 MiB -> ~38 MiB; v5e/v6e: 128 MiB -> ~76 MiB.
    try:
        cap = int(pltpu.get_tpu_info().vmem_capacity_bytes)
        return min(int(cap * 0.6), 96 * 1024 * 1024)
    except Exception:
        return 40 * 1024 * 1024   # safe everywhere (v7x physical is 64 MiB)


def bow_classifier_forward(bow_vec, weight, bias, *,
                           tile_v=4096, tile_b=256, n_split=1,
                           compute_dtype=jnp.float32):
    """bow_vec: (B, V), weight: (C, V) or pre-padded (C, v_pad), bias: (C,) -> (B, C) f32.

    Matches nn.Linear: bow_vec @ weight.T + bias.
    """
    B, V = bow_vec.shape
    C = int(bias.shape[0])
    tk, num_k, v_pad = _v_layout(V, tile_v, n_split)
    k_per_split = num_k // n_split

    assert weight.shape[0] == C and weight.shape[1] in (V, v_pad)

    # Weight: ideally pre-padded once via prepare_bow_weights (call-invariant);
    # fall back to padding here for convenience.
    w = weight
    if w.dtype != compute_dtype:
        w = w.astype(compute_dtype)
    if w.shape[1] != v_pad:
        w = jnp.pad(w, ((0, 0), (0, v_pad - w.shape[1])))

    # x: cast + pad only the ragged V tail (zero columns keep the reduction exact).
    x = bow_vec.astype(compute_dtype)
    if v_pad != V:
        x = jnp.pad(x, ((0, 0), (0, v_pad - V)))

    # Batch: full-B block when it fits (exempt from the 8-sublane rule), else
    # 8-aligned tiles; a ragged last tile only produces discarded OOB rows.
    tb = min(B, _round_up(tile_b, 8))
    num_b = _cdiv(B, tb)

    grid = (n_split, num_b, k_per_split)

    partials = pl.pallas_call(
        _bow_linear_kernel,
        out_shape=jax.ShapeDtypeStruct((n_split, B, C), jnp.float32),
        grid=grid,
        in_specs=[
            # x tile: (tb, tk), streamed over the V chunks of this split.
            pl.BlockSpec((tb, tk), lambda s, b, k: (b, s * k_per_split + k)),
            # weight tile: full C (no 128-padding), streamed over V.
            pl.BlockSpec((C, tk), lambda s, b, k: (0, s * k_per_split + k)),
        ],
        # Partial output per split; block index constant across k -> resident
        # f32 accumulator, written back once per (split, batch-tile).
        out_specs=pl.BlockSpec((None, tb, C), lambda s, b, k: (s, b, 0)),
        compiler_params=pltpu.CompilerParams(
            # split + batch tiles are independent (megacore work on v7x);
            # V is a reduction into the resident output block.
            dimension_semantics=("parallel", "parallel", "arbitrary"),
            vmem_limit_bytes=_vmem_budget_bytes(),
        ),
    )(x, w)

    # Tiny epilogue: combine split partials (n_split is 1 or 2) and add the bias.
    return partials.sum(axis=0) + bias.astype(jnp.float32)[None, :]


if __name__ == "__main__":
    def run_case(batch, vocab_size, n_categories, key, *,
                 n_split=1, compute_dtype=jnp.float32, hoist_weight=False,
                 atol=1e-4, rtol=1e-5):
        k_x, k_w, k_b = jax.random.split(key, 3)
        bound = 1.0 / (vocab_size ** 0.5)
        weight = jax.random.uniform(k_w, (n_categories, vocab_size),
                                    minval=-bound, maxval=bound, dtype=jnp.float32)
        bias = jax.random.uniform(k_b, (n_categories,),
                                  minval=-bound, maxval=bound, dtype=jnp.float32)
        bow_vec = jax.random.randint(
            k_x, (batch, vocab_size), 0, 5).astype(jnp.float32)

        w_arg = weight
        if hoist_weight:
            # Call-invariant weight padding/cast done once, outside the forward.
            w_arg = prepare_bow_weights(weight, n_split=n_split,
                                        compute_dtype=compute_dtype)

        out = jax.block_until_ready(bow_classifier_forward(
            bow_vec, w_arg, bias, n_split=n_split, compute_dtype=compute_dtype))
        ref = bow_vec @ weight.T + bias
        assert out.shape == (batch, n_categories)
        assert jnp.allclose(out, ref, atol=atol, rtol=rtol), "mismatch vs reference"

    key = jax.random.PRNGKey(0)
    k1, k2, k3 = jax.random.split(key, 3)

    # Small shapes consistent with the module (single V tile, no padding, no copies).
    run_case(batch=2, vocab_size=128, n_categories=2, key=k1)

    # Ragged vocab: minimal 128-aligned padding, hoisted (call-invariant) weight,
    # and a 2-way parallel split of the V reduction (second TensorCore work on v7x).
    run_case(batch=2, vocab_size=1200, n_categories=2, key=k2,
             n_split=2, hoist_weight=True)

    # bf16 streamed operands (f32 MXU accumulation) — halves weight HBM traffic.
    run_case(batch=2, vocab_size=1200, n_categories=2, key=k3,
             compute_dtype=jnp.bfloat16, hoist_weight=True,
             atol=5e-2, rtol=5e-2)

    print("KERNEL_OK")
</pallas_src>

<mosaic_0001>
module attributes {stable_mosaic.version = 11 : i64} {
  func.func @_bow_linear_kernel(%arg0: i32, %arg1: i32, %arg2: i32, %arg3: memref<2x128xf32, #tpu.memory_space<vmem>>, %arg4: memref<2x128xf32, #tpu.memory_space<vmem>>, %arg5: memref<1x2x2xf32, #tpu.memory_space<vmem>>) attributes {dimension_semantics = [#tpu.dimension_semantics<parallel>, #tpu.dimension_semantics<parallel>, #tpu.dimension_semantics<arbitrary>], iteration_bounds = array<i64: 1, 1, 1>, scalar_prefetch = 0 : i64, scratch_operands = 0 : i64, tpu.core_type = #tpu.core_type<tc>, window_params = [{transform_indices = @transform_0, window_bounds = array<i64: 2, 128>}, {transform_indices = @transform_1, window_bounds = array<i64: 2, 128>}, {transform_indices = @transform_2, window_bounds = array<i64: 1, 2, 2>}]} {
    %c0_i32 = arith.constant 0 : i32
    %0 = arith.cmpi eq, %arg2, %c0_i32 : i32
    %1 = arith.extui %0 : i1 to i32
    %c0_i32_0 = arith.constant 0 : i32
    %2 = arith.cmpi ne, %1, %c0_i32_0 : i32
    scf.if %2 {
      %cst_10 = arith.constant 0.000000e+00 : f32
      %12 = vector.broadcast %cst_10 : f32 to vector<2x2xf32>
      %c0_11 = arith.constant 0 : index
      %c0_12 = arith.constant 0 : index
      %c0_13 = arith.constant 0 : index
      %13 = vector.load %arg5[%c0_11, %c0_12, %c0_13] : memref<1x2x2xf32, #tpu.memory_space<vmem>>, vector<1x2x2xf32>
      %14 = vector.shape_cast %13 : vector<1x2x2xf32> to vector<2x2xf32>
      %15 = vector.shape_cast %12 : vector<2x2xf32> to vector<1x2x2xf32>
      tpu.vector_store %arg5[%c0_11, %c0_12, %c0_13], %15 {strides = array<i32>} : memref<1x2x2xf32, #tpu.memory_space<vmem>>, vector<1x2x2xf32>,
    } else {
    }
    %c0 = arith.constant 0 : index
    %c0_1 = arith.constant 0 : index
    %c0_2 = arith.constant 0 : index
    %3 = vector.load %arg5[%c0, %c0_1, %c0_2] : memref<1x2x2xf32, #tpu.memory_space<vmem>>, vector<1x2x2xf32>
    %4 = vector.shape_cast %3 : vector<1x2x2xf32> to vector<2x2xf32>
    %c0_3 = arith.constant 0 : index
    %c0_4 = arith.constant 0 : index
    %5 = vector.load %arg3[%c0_3, %c0_4] : memref<2x128xf32, #tpu.memory_space<vmem>>, vector<2x128xf32>
    %c0_5 = arith.constant 0 : index
    %c0_6 = arith.constant 0 : index
    %6 = vector.load %arg4[%c0_5, %c0_6] : memref<2x128xf32, #tpu.memory_space<vmem>>, vector<2x128xf32>
    %cst = arith.constant dense<0.000000e+00> : vector<2x2xf32>
    %7 = tpu.matmul %5, %6, %cst {dimension_numbers = #tpu.dot_dimension_numbers<[1], [1], [0], [0], [0, 0, 1, 0], [], []>} : vector<2x128xf32>, vector<2x128xf32>, vector<2x2xf32> -> vector<2x2xf32>
    %8 = arith.addf %4, %7 : vector<2x2xf32>
    %c0_7 = arith.constant 0 : index
    %c0_8 = arith.constant 0 : index
    %c0_9 = arith.constant 0 : index
    %9 = vector.load %arg5[%c0_7, %c0_8, %c0_9] : memref<1x2x2xf32, #tpu.memory_space<vmem>>, vector<1x2x2xf32>
    %10 = vector.shape_cast %9 : vector<1x2x2xf32> to vector<2x2xf32>
    %11 = vector.shape_cast %8 : vector<2x2xf32> to vector<1x2x2xf32>
    tpu.vector_store %arg5[%c0_7, %c0_8, %c0_9], %11 {strides = array<i32>} : memref<1x2x2xf32, #tpu.memory_space<vmem>>, vector<1x2x2xf32>,
    return
  }
  func.func @transform_0(%arg0: i32, %arg1: i32, %arg2: i32) -> (i32, i32) {
    %c1_i32 = arith.constant 1 : i32
    %0 = arith.muli %arg0, %c1_i32 : i32
    %1 = arith.addi %0, %arg2 : i32
    %c0_i32 = arith.constant 0 : i32
    return %arg1, %1 : i32, i32
  }
  func.func @transform_1(%arg0: i32, %arg1: i32, %arg2: i32) -> (i32, i32) {
    %c1_i32 = arith.constant 1 : i32
    %0 = arith.muli %arg0, %c1_i32 : i32
    %1 = arith.addi %0, %arg2 : i32
    %c0_i32 = arith.constant 0 : i32
    %c0_i32_0 = arith.constant 0 : i32
    return %c0_i32, %1 : i32, i32
  }
  func.func @transform_2(%arg0: i32, %arg1: i32, %arg2: i32) -> (i32, i32, i32) {
    %c0_i32 = arith.constant 0 : i32
    %c0_i32_0 = arith.constant 0 : i32
    return %arg0, %arg1, %c0_i32 : i32, i32, i32
  }
}

</mosaic_0001>

<llo_original>
// kernel: tpu_custom_call.1
$region0: #{tpu_custom_call.1}
  #allocation0 [shape = 'u32[]', space=smem, size = 0x4, offset = 0x4, fixed_abs, tag = 'smem constant byte address 0x4 - core index']
  #allocation1 [shape = 'u32[144,128]{1,0:T(1,128)}', space=vmem, size = 0x12000, scoped, tag = 'internal scratch']
  %s0 = inlined_call_operand.hbm [shape: f32[2,128], index: 0, kind: input, shape index: {}]
  %s1 = inlined_call_operand.vmem [shape: f32[2,128], index: 1, kind: input, shape index: {}]
  %s2 = inlined_call_operand.hbm [shape: f32[1,2,2], index: 2, kind: output, shape index: {}]
  %s3 = sld [smem:[#allocation0]]
  $region26: #{tpu_custom_call.1} parent=0
    _
  %s5 = ssub.s32 1, %s3
  %s6 = scalar_select 0, %s5, %s3
  $region1: #{tpu_custom_call.1} parent=0
    #allocation2 [shape = 'u8[1024]{0}', space=vmem, size = 0x400, scoped, tag = 'input window, operand 0, single buffered']
    #allocation3 [shape = 's32[1]{0}', space=sflag, size = 0x4, scoped, tag = 'scoped memory for tpu_custom_call.1']
    #allocation4 [shape = 's32[1]{0}', space=sflag, size = 0x4, scoped, tag = 'scoped memory for tpu_custom_call.1']
    #allocation5 [shape = 'u8[1024]{0}', space=vmem, size = 0x400, scoped, tag = 'output window, operand 0, single buffered']
    %7 = vsyncpa [#allocation3], 0
    %8 = vsyncpa [#allocation4], 0
    // Predicated region
    $region2: #{tpu_custom_call.1} parent=1 // pred_check
      _
    $region3: #{tpu_custom_call.1} parent=1 // pred_check_branch
      %10 = sbr.rel (0) target = $region5
    $region4: #{tpu_custom_call.1} parent=1 // pred_region
      %s11 = sadd.s32 0, 0
      %s13 = ssub.s32 32, 32
      %14 = vsyncadd [#allocation3], %s13
      %s15 = smul.addr %s11, 32
      %s16 = scalar_lea.hbm %s0, %s15
      %s18 = sshll.u32 [#allocation2], 4
      %s19 = int_to_ptr.vmem [resolvable:$true] %s18
      %21 = dma.hbm_to_vmem [thread:$0]  %s16, 32, %s19, [#allocation3]
    $region5: #{tpu_custom_call.1} parent=1 // pred_fallthru
      _
    // Predicated region
    $region6: #{tpu_custom_call.1} parent=1 // pred_check
      _
    $region7: #{tpu_custom_call.1} parent=1 // pred_check_branch
      %23 = sbr.rel (0) target = $region9
    $region8: #{tpu_custom_call.1} parent=1 // pred_region
      %s24 = sadd.s32 0, 0
      %p25 = scmp.lt.s32.totalorder %s24, 0
      %s26 = scalar_select %p25, %s24, 0
      %s27 = smul.addr %s26, 2
      %s28 = scalar_lea.vmem %s1, %s27
      %s29 = sadd.s32 0, 0
    $region9: #{tpu_custom_call.1} parent=1 // pred_fallthru
      _
    // Predicated region
    $region10: #{tpu_custom_call.1} parent=1 // pred_check
      _
    $region11: #{tpu_custom_call.1} parent=1 // pred_check_branch
      %31 = sbr.rel (0) target = $region13
    $region12: #{tpu_custom_call.1} parent=1 // pred_region
      %32 = dma.done [#allocation3], 32
    $region13: #{tpu_custom_call.1} parent=1 // pred_fallthru
      _
    %s33 = sadd.s32 0, 0
    %p34 = scmp.lt.s32.totalorder %s33, 0
    %s35 = scalar_select %p34, %s33, 0
    %s36 = smul.addr %s35, 2
    %s37 = scalar_lea.vmem %s1, %s36
    %s38 = sadd.s32 0, 0
    %s39 = sadd.s32 0, 0
    %p40 = scmp.lt.s32.totalorder %s39, 0
    %s41 = scalar_select %p40, %s39, 0
    %s42 = smul.addr %s41, 2
    %s43 = scalar_lea.vmem %s1, %s42
    %s44 = sadd.s32 0, 0
    %p45 = scmp.eq.s32.totalorder 0, 0
    // Predicated region
    $region14: #{tpu_custom_call.1} parent=1 // pred_check
      %p46 = pneg %p45
    $region15: #{tpu_custom_call.1} parent=1 // pred_check_branch
      %48 = sbr.rel (%p46) target = $region17
    $region16: #{tpu_custom_call.1} parent=1 // pred_region
      %vm49 = vcmask 9216
      %50 = vst.msk [vmem:[#allocation5] sm:$0x3] %vm49, 0.0
    $region17: #{tpu_custom_call.1} parent=1 // pred_fallthru
      _
    %v51 = vld [vmem:[#allocation5] sm:$0x3]
    %v52 = vld [vmem:[#allocation2] sm:$0x3]
    %v53 = vld [vmem:[%s43] sm:$0x3]
    %54 = vmatprep.subr.mxu0 0.0
    %55 = vmatpush1.xpose.msra.mxu0 %v53
    %56 = vmatprep.subr.mxu0 0.0
    %57 = vmatpush1.xpose.msra.mxu0 0.0
    %58 = vmatprep.subr.mxu0 0.0
    %59 = vmatpush1.xpose.msra.mxu0 0.0
    %60 = vmatprep.subr.mxu0 0.0
    %61 = vmatpush1.xpose.msra.mxu0 0.0
    %62 = vmatprep.subr.mxu0 0.0
    %63 = vmatpush1.xpose.msra.mxu0 0.0
    %64 = vmatprep.subr.mxu0 0.0
    %65 = vmatpush1.xpose.msra.mxu0 0.0
    %66 = vmatprep.subr.mxu0 0.0
    %67 = vmatpush1.xpose.msra.mxu0 0.0
    %68 = vmatprep.subr.mxu0 0.0
    %69 = vmatpush1.xpose.msra.mxu0 0.0
    %70 = vmatprep.subr.mxu0 0.0
    %71 = vmatpush1.xpose.msra.mxu0 0.0
    %72 = vmatprep.subr.mxu0 0.0
    %73 = vmatpush1.xpose.msra.mxu0 0.0
    %74 = vmatprep.subr.mxu0 0.0
    %75 = vmatpush1.xpose.msra.mxu0 0.0
    %76 = vmatprep.subr.mxu0 0.0
    %77 = vmatpush1.xpose.msra.mxu0 0.0
    %78 = vmatprep.subr.mxu0 0.0
    %79 = vmatpush1.xpose.msra.mxu0 0.0
    %80 = vmatprep.subr.mxu0 0.0
    %81 = vmatpush1.xpose.msra.mxu0 0.0
    %82 = vmatprep.subr.mxu0 0.0
    %83 = vmatpush1.xpose.msra.mxu0 0.0
    %84 = vmatprep.subr.mxu0 0.0
    %85 = vmatpush1.xpose.msra.mxu0 0.0
    %86 = vmatprep.subr.mxu0 0.0
    %87 = vmatpush1.xpose.msra.mxu0 0.0
    %88 = vmatprep.subr.mxu0 0.0
    %89 = vmatpush1.xpose.msra.mxu0 0.0
    %90 = vmatprep.subr.mxu0 0.0
    %91 = vmatpush1.xpose.msra.mxu0 0.0
    %92 = vmatprep.subr.mxu0 0.0
    %93 = vmatpush1.xpose.msra.mxu0 0.0
    %94 = vmatprep.subr.mxu0 0.0
    %95 = vmatpush1.xpose.msra.mxu0 0.0
    %96 = vmatprep.subr.mxu0 0.0
    %97 = vmatpush1.xpose.msra.mxu0 0.0
    %98 = vmatprep.subr.mxu0 0.0
    %99 = vmatpush1.xpose.msra.mxu0 0.0
    %100 = vmatprep.subr.mxu0 0.0
    %101 = vmatpush1.xpose.msra.mxu0 0.0
    %102 = vmatprep.subr.mxu0 0.0
    %103 = vmatpush1.xpose.msra.mxu0 0.0
    %104 = vmatprep.subr.mxu0 0.0
    %105 = vmatpush1.xpose.msra.mxu0 0.0
    %106 = vmatprep.subr.mxu0 0.0
    %107 = vmatpush1.xpose.msra.mxu0 0.0
    %108 = vmatprep.subr.mxu0 0.0
    %109 = vmatpush1.xpose.msra.mxu0 0.0
    %110 = vmatprep.subr.mxu0 0.0
    %111 = vmatpush1.xpose.msra.mxu0 0.0
    %112 = vmatprep.subr.mxu0 0.0
    %113 = vmatpush1.xpose.msra.mxu0 0.0
    %114 = vmatprep.subr.mxu0 0.0
    %115 = vmatpush1.xpose.msra.mxu0 0.0
    %116 = vmatprep.subr.mxu0 0.0
    %117 = vmatpush1.xpose.msra.mxu0 0.0
    %118 = vmatprep.mubr.f32.mxu0 0.0
    %119 = vmatmul.mubr.f32.gmra.mrb[0].mxu0 %v52
    %v120 = vpop.f32.mrb[0].mxu0
    %v121 = vadd.f32 0.0, %v120
    %v122 = vpop.f32.mrb[0].mxu0
    %123 = vdwg.mxu0
    %v124 = vadd.f32 %v51, %v121
    %vm125 = vcmask 9216
    %126 = vst.msk [vmem:[#allocation5] sm:$0x3] %vm125, %v124
    // Predicated region
    $region18: #{tpu_custom_call.1} parent=1 // pred_check
      _
    $region19: #{tpu_custom_call.1} parent=1 // pred_check_branch
      %128 = sbr.rel (0) target = $region21
    $region20: #{tpu_custom_call.1} parent=1 // pred_region
      %s130 = ssub.s32 32, 32
      %131 = vsyncadd [#allocation4], %s130
      %s133 = sshll.u32 [#allocation5], 4
      %s134 = int_to_ptr.vmem [resolvable:$true] %s133
      %136 = dma.vmem_to_hbm [thread:$0]  %s134, 32, %s2, [#allocation4]
    $region21: #{tpu_custom_call.1} parent=1 // pred_fallthru
      _
    // Predicated region
    $region22: #{tpu_custom_call.1} parent=1 // pred_check
      _
    $region23: #{tpu_custom_call.1} parent=1 // pred_check_branch
      %138 = sbr.rel (0) target = $region25
    $region24: #{tpu_custom_call.1} parent=1 // pred_region
      %139 = dma.done [#allocation4], 32
    $region25: #{tpu_custom_call.1} parent=1 // pred_fallthru
      _
    %140 = vsyncpa [#allocation3], 1
    %141 = vsyncpa [#allocation4], 1

</llo_original>
